<compile_context>
chip_gen: v5e
topology: v5e:2x2
jax: 0.10.0
libtpu: 0.0.40
codegen_flags: <defaults>
</compile_context>

<pallas_src>
import functools

import jax
import jax.numpy as jnp
from jax import lax
from jax.experimental import pallas as pl
from jax.experimental.pallas import tpu as pltpu

BN_EPS = 1e-5


def _decoder_kernel(x_ref, w_ref, gb_ref, o_ref):
    # x_ref:  (B, Z)      full batch, full latent dim (bf16)
    # w_ref:  (Z, TN)     one tile of concatenated transposed weights (bf16)
    # gb_ref: (2, TN)     row 0 = gamma, row 1 = beta (f32)
    # o_ref:  (B, TN)     output tile (f32)

    # Linear (no bias) on the MXU, f32 accumulation.
    h = jnp.dot(x_ref[...], w_ref[...], preferred_element_type=jnp.float32)
    h = jnp.maximum(h, 0.0)  # ReLU

    # BatchNorm1d (training mode, biased variance) folded into one per-column
    # scale/shift: two one-pass reductions + a single normalize pass over h.
    inv_b = jnp.float32(1.0 / h.shape[0])
    s1 = jnp.sum(h, axis=0, keepdims=True)          # (1, TN)
    s2 = jnp.sum(h * h, axis=0, keepdims=True)      # (1, TN)
    mean = s1 * inv_b
    var = s2 * inv_b - mean * mean                  # E[h^2] - mean^2 (f32, ReLU-scale: safe)
    gamma = gb_ref[0:1, :]
    beta = gb_ref[1:2, :]
    scale = gamma * lax.rsqrt(var + BN_EPS)         # rsqrt -> EUP slot
    shift = beta - mean * scale
    o_ref[...] = (h * scale + shift).astype(o_ref.dtype)


def _pick_tile_n(f_total):
    """Largest lane-dense tile (<=512) that still yields >=2 grid steps (v7x has 2 TCs)."""
    for cand in (512, 256, 128):
        if f_total % cand == 0 and f_total // cand >= 2:
            return cand
    # Tiny problems: one step over the whole feature dim (must be a multiple of 128).
    return f_total


@functools.partial(jax.jit, static_argnames=("tile_n", "compute_dtype"))
def decoder_forward(x, w_cat, gamma, beta, *, tile_n=None, compute_dtype=jnp.bfloat16):
    """x: (B, Z) f32; w_cat: (Z, F_total); gamma/beta: (F_total,) -> (B, F_total) f32."""
    B, Z = x.shape
    F_total = w_cat.shape[1]
    if tile_n is None:
        tile_n = _pick_tile_n(F_total)
    assert F_total % tile_n == 0, "pad concatenated feature dim to a multiple of tile_n"
    assert tile_n % 128 == 0, "feature tile must be lane-dense (multiple of 128)"

    # bf16 weight/activation stream (dominant DMA), f32 BN parameters.
    x_c = x.astype(compute_dtype)
    w_c = w_cat.astype(compute_dtype)
    gb = jnp.stack([gamma, beta], axis=0).astype(jnp.float32)  # (2, F_total)

    grid = (F_total // tile_n,)

    # Explicit VMEM budget (keeps larger tiles viable on v7x's 64 MiB VMEM / 32 MiB
    # default scoped limit).  x is tiny but still double-buffered by BlockSpec.
    in_b = jnp.dtype(compute_dtype).itemsize
    needed = (
        2 * B * Z * in_b                 # x (double-buffered)
        + 2 * Z * tile_n * in_b          # weight tile (double-buffered)
        + 2 * 2 * tile_n * 4             # gamma/beta tile (double-buffered)
        + 2 * B * tile_n * 4             # output tile (double-buffered)
        + 2 * B * tile_n * 4             # live f32 h + spill headroom
    )
    vmem_limit = min(max(2 * needed, 32 << 20), 64 << 20)

    return pl.pallas_call(
        _decoder_kernel,
        out_shape=jax.ShapeDtypeStruct((B, F_total), jnp.float32),
        grid_spec=pltpu.PrefetchScalarGridSpec(
            num_scalar_prefetch=0,
            grid=grid,
            in_specs=[
                pl.BlockSpec((B, Z), lambda j: (0, 0)),        # x: resident full block
                pl.BlockSpec((Z, tile_n), lambda j: (0, j)),   # weight tile
                pl.BlockSpec((2, tile_n), lambda j: (0, j)),   # fused gamma/beta tile
            ],
            out_specs=pl.BlockSpec((B, tile_n), lambda j: (0, j)),
        ),
        compiler_params=pltpu.CompilerParams(
            dimension_semantics=("parallel",),
            vmem_limit_bytes=int(vmem_limit),
        ),
    )(x_c, w_c, gb)


def _reference(x, w_cat, gamma, beta, compute_dtype=jnp.bfloat16):
    # Same numerics as the kernel: bf16 matmul with f32 accumulation, f32 BN math.
    h = jnp.dot(x.astype(compute_dtype), w_cat.astype(compute_dtype),
                preferred_element_type=jnp.float32)
    h = jnp.maximum(h, 0.0)
    mean = jnp.mean(h, axis=0, keepdims=True)
    var = jnp.mean(h * h, axis=0, keepdims=True) - mean * mean
    return gamma[None, :] * (h - mean) * lax.rsqrt(var + BN_EPS) + beta[None, :]


if __name__ == "__main__":
    # Small shapes consistent with Decoder(num_features=[96, 160], z_dim=32), batch=8.
    batch = 8
    z_dim = 32
    num_features = [96, 160]
    f_total = sum(num_features)  # 256 -> two 128-wide grid steps (balanced on v7x)

    key = jax.random.PRNGKey(0)
    k_x, *k_ws = jax.random.split(key, 1 + len(num_features))

    x = jax.random.normal(k_x, (batch, z_dim), dtype=jnp.float32)

    # Per-modality Linear weights (PyTorch shape (n_out, n_in)), uniform(-1/sqrt(n_in), ...).
    bound = 1.0 / float(z_dim) ** 0.5
    w_list = [
        jax.random.uniform(k, (nf, z_dim), dtype=jnp.float32, minval=-bound, maxval=bound)
        for k, nf in zip(k_ws, num_features)
    ]
    # Concatenate transposed weights along the output-feature axis: (Z, F_total).
    w_cat = jnp.concatenate([w.T for w in w_list], axis=1)

    # BatchNorm1d affine params at PyTorch defaults (gamma=1, beta=0), concatenated.
    gamma = jnp.ones((f_total,), dtype=jnp.float32)
    beta = jnp.zeros((f_total,), dtype=jnp.float32)

    # TODO(synk): PyTorch BatchNorm1d (training mode) also updates running_mean/var as a
    # side effect; only the forward output is reproduced here.
    out = decoder_forward(x, w_cat, gamma, beta)
    out = jax.block_until_ready(out)

    ref = _reference(x, w_cat, gamma, beta)
    assert out.shape == (batch, f_total)
    assert jnp.allclose(out, ref, atol=2e-3, rtol=2e-3), "mismatch vs reference"

    print("KERNEL_OK")
</pallas_src>

<mosaic_0001>
module attributes {stable_mosaic.version = 11 : i64} {
  func.func @_decoder_kernel(%arg0: i32, %arg1: memref<8x32xbf16, #tpu.memory_space<vmem>>, %arg2: memref<32x128xbf16, #tpu.memory_space<vmem>>, %arg3: memref<2x128xf32, #tpu.memory_space<vmem>>, %arg4: memref<8x128xf32, #tpu.memory_space<vmem>>) attributes {dimension_semantics = [#tpu.dimension_semantics<parallel>], iteration_bounds = array<i64: 2>, scalar_prefetch = 0 : i64, scratch_operands = 0 : i64, tpu.core_type = #tpu.core_type<tc>, window_params = [{pipeline_mode = #tpu.pipeline_mode<synchronous>, transform_indices = @transform_0, window_bounds = array<i64: 8, 32>}, {transform_indices = @transform_1, window_bounds = array<i64: 32, 128>}, {transform_indices = @transform_2, window_bounds = array<i64: 2, 128>}, {transform_indices = @transform_3, window_bounds = array<i64: 8, 128>}]} {
    %c0 = arith.constant 0 : index
    %c0_0 = arith.constant 0 : index
    %0 = vector.load %arg1[%c0, %c0_0] : memref<8x32xbf16, #tpu.memory_space<vmem>>, vector<8x32xbf16>
    %c0_1 = arith.constant 0 : index
    %c0_2 = arith.constant 0 : index
    %1 = vector.load %arg2[%c0_1, %c0_2] : memref<32x128xbf16, #tpu.memory_space<vmem>>, vector<32x128xbf16>
    %cst = arith.constant dense<0.000000e+00> : vector<8x128xf32>
    %2 = tpu.matmul %0, %1, %cst {dimension_numbers = #tpu.dot_dimension_numbers<[1], [0], [0], [1], [0, 0, 1, 1], [], []>} : vector<8x32xbf16>, vector<32x128xbf16>, vector<8x128xf32> -> vector<8x128xf32>
    %cst_3 = arith.constant 0.000000e+00 : f32
    %3 = vector.broadcast %cst_3 : f32 to vector<8x128xf32>
    %4 = arith.maximumf %2, %3 : vector<8x128xf32>
    %cst_4 = arith.constant dense<0.000000e+00> : vector<128xf32>
    %5 = vector.multi_reduction <add>, %4, %cst_4 [0] : vector<8x128xf32> to vector<128xf32>
    %6 = vector.shape_cast %5 : vector<128xf32> to vector<1x128xf32>
    %7 = arith.mulf %4, %4 : vector<8x128xf32>
    %cst_5 = arith.constant dense<0.000000e+00> : vector<128xf32>
    %8 = vector.multi_reduction <add>, %7, %cst_5 [0] : vector<8x128xf32> to vector<128xf32>
    %9 = vector.shape_cast %8 : vector<128xf32> to vector<1x128xf32>
    %cst_6 = arith.constant 1.250000e-01 : f32
    %10 = vector.broadcast %cst_6 : f32 to vector<1x128xf32>
    %11 = arith.mulf %6, %10 : vector<1x128xf32>
    %cst_7 = arith.constant 1.250000e-01 : f32
    %12 = vector.broadcast %cst_7 : f32 to vector<1x128xf32>
    %13 = arith.mulf %9, %12 : vector<1x128xf32>
    %14 = arith.mulf %11, %11 : vector<1x128xf32>
    %15 = arith.subf %13, %14 : vector<1x128xf32>
    %c0_8 = arith.constant 0 : index
    %c0_9 = arith.constant 0 : index
    %16 = vector.load %arg3[%c0_8, %c0_9] : memref<2x128xf32, #tpu.memory_space<vmem>>, vector<1x128xf32>
    %c1 = arith.constant 1 : index
    %c0_10 = arith.constant 0 : index
    %17 = vector.load %arg3[%c1, %c0_10] : memref<2x128xf32, #tpu.memory_space<vmem>>, vector<1x128xf32>
    %cst_11 = arith.constant 9.99999974E-6 : f32
    %18 = vector.broadcast %cst_11 : f32 to vector<1x128xf32>
    %19 = arith.addf %15, %18 : vector<1x128xf32>
    %20 = math.rsqrt %19 : vector<1x128xf32>
    %21 = arith.mulf %16, %20 : vector<1x128xf32>
    %22 = arith.mulf %11, %21 : vector<1x128xf32>
    %23 = arith.subf %17, %22 : vector<1x128xf32>
    %24 = vector.broadcast %21 : vector<1x128xf32> to vector<8x128xf32>
    %25 = arith.mulf %4, %24 : vector<8x128xf32>
    %26 = vector.broadcast %23 : vector<1x128xf32> to vector<8x128xf32>
    %27 = arith.addf %25, %26 : vector<8x128xf32>
    %c0_12 = arith.constant 0 : index
    %c0_13 = arith.constant 0 : index
    %28 = vector.load %arg4[%c0_12, %c0_13] : memref<8x128xf32, #tpu.memory_space<vmem>>, vector<8x128xf32>
    tpu.vector_store %arg4[%c0_12, %c0_13], %27 {strides = array<i32>} : memref<8x128xf32, #tpu.memory_space<vmem>>, vector<8x128xf32>,
    return
  }
  func.func @transform_0(%arg0: i32) -> (i32, i32) {
    %c0_i32 = arith.constant 0 : i32
    %c0_i32_0 = arith.constant 0 : i32
    %c0_i32_1 = arith.constant 0 : i32
    return %c0_i32, %c0_i32_0 : i32, i32
  }
  func.func @transform_1(%arg0: i32) -> (i32, i32) {
    %c0_i32 = arith.constant 0 : i32
    %c0_i32_0 = arith.constant 0 : i32
    return %c0_i32, %arg0 : i32, i32
  }
  func.func @transform_2(%arg0: i32) -> (i32, i32) {
    %c0_i32 = arith.constant 0 : i32
    %c0_i32_0 = arith.constant 0 : i32
    return %c0_i32, %arg0 : i32, i32
  }
  func.func @transform_3(%arg0: i32) -> (i32, i32) {
    %c0_i32 = arith.constant 0 : i32
    %c0_i32_0 = arith.constant 0 : i32
    return %c0_i32, %arg0 : i32, i32
  }
}

</mosaic_0001>

<llo_original>
// kernel: decoder_forward.1
$region0: #{decoder_forward.1}
  #allocation0 [shape = 'u32[]', space=smem, size = 0x4, offset = 0x4, fixed_abs, tag = 'smem constant byte address 0x4 - core index']
  #allocation1 [shape = 'u32[72,128]{1,0:T(1,128)}', space=vmem, size = 0x9000, scoped, tag = 'internal scratch']
  %s0 = inlined_call_operand.vmem [shape: bf16[8,32], index: 0, kind: input, shape index: {}]
  %s1 = inlined_call_operand.vmem [shape: bf16[32,256], index: 1, kind: input, shape index: {}]
  %s2 = inlined_call_operand.vmem [shape: f32[2,256], index: 2, kind: input, shape index: {}]
  %s3 = inlined_call_operand.hbm [shape: f32[8,256], index: 3, kind: output, shape index: {}]
  %s4 = sld [smem:[#allocation0]]
  $region86: #{decoder_forward.1} parent=0
    _
  %s6 = ssub.s32 1, %s4
  %s7 = scalar_select 0, %s6, %s4
  $region1: #{decoder_forward.1} parent=0
    #allocation2 [shape = 'u8[16384]{0}', space=vmem, size = 0x4000, scoped, tag = 'input window, operand 1']
    #allocation3 [shape = 'u8[8192]{0}', space=vmem, size = 0x2000, scoped, tag = 'output window, operand 0']
    #allocation4 [shape = 's32[2]{0}', space=sflag, size = 0x8, scoped, tag = 'scoped memory for decoder_forward.1']
    %8 = vsyncpa [#allocation4], 0
    %s9 = scalar_lea.sflag [#allocation4], 1
    %10 = vsyncpa %s9, 0
    loop: start=0, step=1, limit=4
    $region2: #{decoder_forward.1} parent=1 // loop_pre_header
      _
    $region3: #{decoder_forward.1} parent=1 // loop_header
      %s12 = sphi 0, %s16
      %p13 = scmp.ge.s32.totalorder %s12, 4
      %s20 = sphi 0, %s20
      %s22 = sphi 0, %s20
      %s23 = sphi 0, %s22
      %s37 = sphi 0, %s23
      %s43 = sphi 0, %s45
      %s46 = sphi 0, %s43
      %s47 = sphi 0, %s46
      %s63 = sphi 0, %s47
      %s69 = sphi 0, %s71
      %s72 = sphi 0, %s69
      %s73 = sphi 0, %s72
      %s89 = sphi 0, %s73
      %s95 = sphi 0, %s97
      %s98 = sphi 0, %s95
      %s99 = sphi 0, %s98
      %s115 = sphi 0, %s99
    $region4: #{decoder_forward.1} parent=1 // loop_header_branch
      %15 = sbr.rel (%p13) target = $region8
    $region5: #{decoder_forward.1} parent=1 // loop_body
      %s17 = ssub.s32 %s12, 1
      %s18 = ssub.s32 %s12, 2
      %s19 = sadd.s32 %s12, 1
      %s21 = sadd.s32 %s20, 1
      %p24 = scmp.eq.s32.totalorder %s12, 1
      %p25 = scmp.ne.s32.totalorder %s20, %s22
      %p26 = scmp.eq.s32.totalorder %s12, 0
      %p27 = por %p25, %p26
      %p28 = scmp.ne.s32.totalorder %s20, %s22
      %p29 = scmp.eq.s32.totalorder %s17, 1
      %p30 = por %p28, %p29
      %p31 = scmp.ne.s32.totalorder %s22, %s23
      %p32 = scmp.eq.s32.totalorder %s17, 0
      %p33 = por %p31, %p32
      %p34 = scmp.ne.s32.totalorder %s22, %s23
      %p35 = scmp.eq.s32.totalorder %s18, 1
      %p36 = por %p34, %p35
      %p38 = scmp.ne.s32.totalorder %s23, %s37
      %p39 = scmp.eq.s32.totalorder %s18, 0
      %p40 = por %p38, %p39
      %s41 = ssub.s32 %s12, %s19
      %p42 = scmp.eq.s32.totalorder %s41, 0
      %s44 = sadd.s32 %s43, 1
      %s45 = scalar_select %p42, %s43, %s44
      %p48 = pneg %p42
      %p49 = scmp.eq.s32.totalorder %s12, 1
      %p50 = por %p48, %p49
      %p51 = scmp.ne.s32.totalorder %s43, %s46
      %p52 = scmp.eq.s32.totalorder %s12, 0
      %p53 = por %p51, %p52
      %p54 = scmp.ne.s32.totalorder %s43, %s46
      %p55 = scmp.eq.s32.totalorder %s17, 1
      %p56 = por %p54, %p55
      %p57 = scmp.ne.s32.totalorder %s46, %s47
      %p58 = scmp.eq.s32.totalorder %s17, 0
      %p59 = por %p57, %p58
      %p60 = scmp.ne.s32.totalorder %s46, %s47
      %p61 = scmp.eq.s32.totalorder %s18, 1
      %p62 = por %p60, %p61
      %p64 = scmp.ne.s32.totalorder %s47, %s63
      %p65 = scmp.eq.s32.totalorder %s18, 0
      %p66 = por %p64, %p65
      %s67 = ssub.s32 %s12, %s19
      %p68 = scmp.eq.s32.totalorder %s67, 0
      %s70 = sadd.s32 %s69, 1
      %s71 = scalar_select %p68, %s69, %s70
      %p74 = pneg %p68
      %p75 = scmp.eq.s32.totalorder %s12, 1
      %p76 = por %p74, %p75
      %p77 = scmp.ne.s32.totalorder %s69, %s72
      %p78 = scmp.eq.s32.totalorder %s12, 0
      %p79 = por %p77, %p78
      %p80 = scmp.ne.s32.totalorder %s69, %s72
      %p81 = scmp.eq.s32.totalorder %s17, 1
      %p82 = por %p80, %p81
      %p83 = scmp.ne.s32.totalorder %s72, %s73
      %p84 = scmp.eq.s32.totalorder %s17, 0
      %p85 = por %p83, %p84
      %p86 = scmp.ne.s32.totalorder %s72, %s73
      %p87 = scmp.eq.s32.totalorder %s18, 1
      %p88 = por %p86, %p87
      %p90 = scmp.ne.s32.totalorder %s73, %s89
      %p91 = scmp.eq.s32.totalorder %s18, 0
      %p92 = por %p90, %p91
      %s93 = ssub.s32 %s12, %s19
      %p94 = scmp.eq.s32.totalorder %s93, 0
      %s96 = sadd.s32 %s95, 1
      %s97 = scalar_select %p94, %s95, %s96
      %p100 = pneg %p94
      %p101 = scmp.eq.s32.totalorder %s12, 1
      %p102 = por %p100, %p101
      %p103 = scmp.ne.s32.totalorder %s95, %s98
      %p104 = scmp.eq.s32.totalorder %s12, 0
      %p105 = por %p103, %p104
      %p106 = scmp.ne.s32.totalorder %s95, %s98
      %p107 = scmp.eq.s32.totalorder %s17, 1
      %p108 = por %p106, %p107
      %p109 = scmp.ne.s32.totalorder %s98, %s99
      %p110 = scmp.eq.s32.totalorder %s17, 0
      %p111 = por %p109, %p110
      %p112 = scmp.ne.s32.totalorder %s98, %s99
      %p113 = scmp.eq.s32.totalorder %s18, 1
      %p114 = por %p112, %p113
      %p116 = scmp.ne.s32.totalorder %s99, %s115
      %p117 = scmp.eq.s32.totalorder %s18, 0
      %p118 = por %p116, %p117
      %p119 = scmp.le.s32.totalorder 1, %s12
      %p120 = scmp.lt.s32.totalorder %s12, 3
      %p121 = pnand %p119, %p120
      %p122 = pneg %p121
      // Predicated region
      $region9: #{decoder_forward.1} parent=5 // pred_check
        _
      $region10: #{decoder_forward.1} parent=5 // pred_check_branch
        %124 = sbr.rel (%p121) target = $region12
      $region11: #{decoder_forward.1} parent=5 // pred_region
        %s125 = ssub.s32 %s12, 1
        // Predicated region
        $region13: #{decoder_forward.1} parent=11 // pred_check
          %p126 = pneg %p33
        $region14: #{decoder_forward.1} parent=11 // pred_check_branch
          %128 = sbr.rel (%p126) target = $region16
        $region15: #{decoder_forward.1} parent=11 // pred_region
          _
        $region16: #{decoder_forward.1} parent=11 // pred_fallthru
          _
      $region12: #{decoder_forward.1} parent=5 // pred_fallthru
        _
      %p129 = scmp.lt.s32.totalorder %s12, 2
      // Predicated region
      $region17: #{decoder_forward.1} parent=5 // pred_check
        %p130 = pneg %p129
      $region18: #{decoder_forward.1} parent=5 // pred_check_branch
        %132 = sbr.rel (%p130) target = $region20
      $region19: #{decoder_forward.1} parent=5 // pred_region
        // Predicated region
        $region21: #{decoder_forward.1} parent=19 // pred_check
          %p133 = pneg %p53
        $region22: #{decoder_forward.1} parent=19 // pred_check_branch
          %135 = sbr.rel (%p133) target = $region24
        $region23: #{decoder_forward.1} parent=19 // pred_region
          %s136 = sand.u32 %s43, 1
          %s137 = sand.u32 %s43, 1
          %s138 = smul.addr %s137, 16
          %s139 = scalar_lea.vmem [#allocation2], %s138
          %s140 = smul.addr %s12, 4
          %s141 = scalar_lea.vmem %s1, %s140
          // Predicated region
          $region25: #{decoder_forward.1} parent=23 // pred_check
            _
          $region26: #{decoder_forward.1} parent=23 // pred_check_branch
            %143 = sbr.rel (0) target = $region28
          $region27: #{decoder_forward.1} parent=23 // pred_region
            // Predicated region
            $region29: #{decoder_forward.1} parent=27 // pred_check
              _
            $region30: #{decoder_forward.1} parent=27 // pred_check_branch
              %145 = sbr.rel target = $region32
            $region31: #{decoder_forward.1} parent=27 // pred_region
              // Predicated region
              $region44: #{decoder_forward.1} parent=31 // pred_check
                _
              $region45: #{decoder_forward.1} parent=31 // pred_check_branch
                %167 = sbr.rel (0) target = $region47
              $region46: #{decoder_forward.1} parent=31 // pred_region
                loop: start=0, step=1, limit=1
                $region48: #{decoder_forward.1} parent=46 // loop_pre_header
                  _
                $region49: #{decoder_forward.1} parent=46 // loop_header
                  %s169 = sphi 0, %s173
                  %p170 = scmp.ge.s32.totalorder %s169, 1
                  %s174 = sphi %s141, %s141
                  %s175 = sphi %s139, %s139
                $region50: #{decoder_forward.1} parent=46 // loop_header_branch
                  %172 = sbr.rel (%p170) target = $region54
                $region51: #{decoder_forward.1} parent=46 // loop_body
                  _
                $region52: #{decoder_forward.1} parent=46 // loop_footer
                  %s173 = sadd.s32 1, %s169
                $region53: #{decoder_forward.1} parent=46 // loop_footer_branch
                  %168 = sbr.rel target = $region49
                $region54: #{decoder_forward.1} parent=46 // loop_exit
                  _
                %s177 = ssub.s32 16, 1
                loop: start=0, step=1, limit=1
                $region55: #{decoder_forward.1} parent=46 // loop_pre_header
                  _
                $region56: #{decoder_forward.1} parent=46 // loop_header
                  %s179 = sphi 0, %s183
                  %p180 = scmp.ge.s32.totalorder %s179, 1
                  %s184 = sphi %s141, %s141
                  %s185 = sphi %s139, %s139
                $region57: #{decoder_forward.1} parent=46 // loop_header_branch
                  %182 = sbr.rel (%p180) target = $region61
                $region58: #{decoder_forward.1} parent=46 // loop_body
                  %v186 = vld [vmem:[%s184] sm:%s177]
                  %187 = vst [vmem:[%s185] sm:%s177] %v186
                  %v188 = vld [vmem:[%s184 + $0x8] sm:%s177]
                  %189 = vst [vmem:[%s185 + $0x4] sm:%s177] %v188
                  %v190 = vld [vmem:[%s184 + $0x10] sm:%s177]
                  %191 = vst [vmem:[%s185 + $0x8] sm:%s177] %v190
                  %v192 = vld [vmem:[%s184 + $0x18] sm:%s177]
                  %193 = vst [vmem:[%s185 + $0xc] sm:%s177] %v192
                $region59: #{decoder_forward.1} parent=46 // loop_footer
                  %s183 = sadd.s32 1, %s179
                $region60: #{decoder_forward.1} parent=46 // loop_footer_branch
                  %178 = sbr.rel target = $region56
                $region61: #{decoder_forward.1} parent=46 // loop_exit
                  _
              $region47: #{decoder_forward.1} parent=31 // pred_fallthru
                _
            $region32: #{decoder_forward.1} parent=27 // pred_fallthru
              _
            // Predicated region
            $region33: #{decoder_forward.1} parent=27 // pred_check
              _
            $region34: #{decoder_forward.1} parent=27 // pred_check_branch
              %147 = sbr.rel (0) target = $region36
            $region35: #{decoder_forward.1} parent=27 // pred_region
              %s149 = ssub.s32 16, 1
              loop: start=0, step=1, limit=1
              $region37: #{decoder_forward.1} parent=35 // loop_pre_header
                _
              $region38: #{decoder_forward.1} parent=35 // loop_header
                %s151 = sphi 0, %s155
                %p152 = scmp.ge.s32.totalorder %s151, 1
                %s156 = sphi %s141, %s141
                %s157 = sphi %s139, %s139
              $region39: #{decoder_forward.1} parent=35 // loop_header_branch
                %154 = sbr.rel (%p152) target = $region43
              $region40: #{decoder_forward.1} parent=35 // loop_body
                %v158 = vld [vmem:[%s156] sm:%s149]
                %159 = vst [vmem:[%s157] sm:%s149] %v158
                %v160 = vld [vmem:[%s156 + $0x8] sm:%s149]
                %161 = vst [vmem:[%s157 + $0x4] sm:%s149] %v160
                %v162 = vld [vmem:[%s156 + $0x10] sm:%s149]
                %163 = vst [vmem:[%s157 + $0x8] sm:%s149] %v162
                %v164 = vld [vmem:[%s156 + $0x18] sm:%s149]
                %165 = vst [vmem:[%s157 + $0xc] sm:%s149] %v164
              $region41: #{decoder_forward.1} parent=35 // loop_footer
                %s155 = sadd.s32 1, %s151
              $region42: #{decoder_forward.1} parent=35 // loop_footer_branch
                %150 = sbr.rel target = $region38
              $region43: #{decoder_forward.1} parent=35 // loop_exit
                _
            $region36: #{decoder_forward.1} parent=27 // pred_fallthru
              _
          $region28: #{decoder_forward.1} parent=23 // pred_fallthru
            _
          %194 = vnop
        $region24: #{decoder_forward.1} parent=19 // pred_fallthru
          _
        // Predicated region
        $region62: #{decoder_forward.1} parent=19 // pred_check
          %p195 = pneg %p79
        $region63: #{decoder_forward.1} parent=19 // pred_check_branch
          %197 = sbr.rel (%p195) target = $region65
        $region64: #{decoder_forward.1} parent=19 // pred_region
          %p198 = scmp.lt.s32.totalorder %s12, 1
          %s199 = scalar_select %p198, %s12, 1
          %s200 = smul.addr %s199, 2
          %s201 = scalar_lea.vmem %s2, %s200
        $region65: #{decoder_forward.1} parent=19 // pred_fallthru
          _
      $region20: #{decoder_forward.1} parent=5 // pred_fallthru
        _
      %p202 = scmp.le.s32.totalorder 1, %s12
      %p203 = scmp.lt.s32.totalorder %s12, 3
      %p204 = pnand %p202, %p203
      %p205 = pneg %p204
      // Predicated region
      $region66: #{decoder_forward.1} parent=5 // pred_check
        _
      $region67: #{decoder_forward.1} parent=5 // pred_check_branch
        %207 = sbr.rel (%p204) target = $region69
      $region68: #{decoder_forward.1} parent=5 // pred_region
        %s208 = ssub.s32 %s12, 1
        %s209 = sand.u32 %s46, 1
        %s210 = sand.u32 %s46, 1
        %s211 = smul.addr %s210, 16
        %s212 = scalar_lea.vmem [#allocation2], %s211
        // Predicated region
        $region70: #{decoder_forward.1} parent=68 // pred_check
          %p213 = pneg %p59
        $region71: #{decoder_forward.1} parent=68 // pred_check_branch
          %215 = sbr.rel (%p213) target = $region73
        $region72: #{decoder_forward.1} parent=68 // pred_region
          _
        $region73: #{decoder_forward.1} parent=68 // pred_fallthru
          _
        %p216 = pneg %p33
        %p217 = pneg %p30
        %s218 = sand.u32 %s46, 1
        %s219 = sand.u32 %s46, 1
        %s220 = smul.addr %s219, 16
        %s221 = scalar_lea.vmem [#allocation2], %s220
        %p222 = pneg %p59
        %p223 = pneg %p56
        %p224 = scmp.lt.s32.totalorder %s17, 1
        %s225 = scalar_select %p224, %s17, 1
        %s226 = smul.addr %s225, 2
        %s227 = scalar_lea.vmem %s2, %s226
        %p228 = pneg %p85
        %p229 = pneg %p82
        %p230 = pneg %p111
        %p231 = pneg %p108
        %s232 = sand.u32 %s98, 1
        %s233 = scalar_lea.sflag [#allocation4], %s232
        %s234 = sand.u32 %s98, 1
        %s235 = smul.addr %s234, 8
        %s236 = scalar_lea.vmem [#allocation3], %s235
        %p237 = scmp.lt.s32.totalorder %s17, 1
        %s238 = scalar_select %p237, %s17, 1
        %s239 = smul.addr %s238, 2
        %s240 = scalar_lea.vmem %s2, %s239
        %v242 = vld [vmem:[%s0] sm:$0xf]
        %v243 = vld [vmem:[%s212] sm:$0xf]
        %v244 = vld [vmem:[%s212 + $0x4] sm:$0xf]
        %v245 = vld [vmem:[%s212 + $0x8] sm:$0xf]
        %v246 = vld [vmem:[%s212 + $0xc] sm:$0xf]
        %v251 = vunpack.c.l.b16 %v243
        %v252 = vunpack.c.l.b16 %v244
        %v253 = vunpack.c.l.b16 %v245
        %v254 = vunpack.c.l.b16 %v246
        %v255 = vpack.c.b16 %v252, %v251
        %v256 = vpack.c.b16 %v254, %v253
        %vm259 = vcmask 261120
        %v261 = vsel %vm259, %v242, 0
        %263 = vmatpush.bf16.msra.mxu0 0
        %264 = vmatpush.bf16.msra.mxu0 0
        %265 = vmatpush.bf16.msra.mxu0 0
        %266 = vmatpush.bf16.msra.mxu0 0
        %267 = vmatpush.bf16.msra.mxu0 0
        %268 = vmatpush.bf16.msra.mxu0 0
        %269 = vmatpush.bf16.msra.mxu0 %v256
        %270 = vmatpush.bf16.msra.mxu0 %v255
        %271 = vmatmul.bf16.gmra.mxu0 %v261
        %v272 = vpop.f32.mrf.mxu0
        %v273 = vadd.f32 0.0, %v272
        %v274 = vpop.f32.mrf.mxu0
        %275 = vdwg.mxu0
        %v276 = vmax.f32 %v273, 0.0
        %v277 = vrot.slane %v276, 4
        %v278 = vadd.f32 %v276, %v277
        %v279 = vrot.slane %v278, 2
        %v280 = vadd.f32 %v278, %v279
        %v281 = vrot.slane %v280, 1
        %v282 = vadd.f32 %v280, %v281
        %v283 = vmul.f32 %v276, %v276
        %v284 = vrot.slane %v283, 4
        %v285 = vadd.f32 %v283, %v284
        %v286 = vrot.slane %v285, 2
        %v287 = vadd.f32 %v285, %v286
        %v288 = vrot.slane %v287, 1
        %v289 = vadd.f32 %v287, %v288
        %v290 = vmul.f32 %v282, 0.125
        %v291 = vmul.f32 %v289, 0.125
        %v292 = vmul.f32 %v290, %v290
        %v293 = vsub.f32 %v291, %v292
        %v294 = vld [vmem:[%s240] sm:$0x1]
        %v295 = vld [vmem:[%s240 + $0x1] sm:$0x1]
        %v296 = vadd.f32 %v293, 1e-05
        %v297 = vrsqrt.pop %v296
        %v298 = vmul.f32 %v297, %v296
        %v299 = vmul.f32 %v298, %v297
        %v300 = vmul.f32 0.5, %v299
        %v301 = vsub.f32 1.5, %v300
        %v302 = vmul.f32 %v297, %v301
        %vm303 = vweird.f32 %v296
        %vm304 = vweird.f32 %v297
        %vm305 = vmor %vm303, %vm304
        %v306 = vsel %vm305, %v297, %v302
        %v307 = vmul.f32 %v294, %v306
        %v308 = vmul.f32 %v290, %v307
        %v309 = vsub.f32 %v295, %v308
        %v310 = vperm.slane %v307, 0
        %v311 = vmul.f32 %v276, %v310
        %v312 = vperm.slane %v309, 0
        %v313 = vadd.f32 %v311, %v312
        %314 = vst [vmem:[%s236] sm:$0xff] %v313
        %s315 = sand.u32 %s98, 1
        %s316 = scalar_lea.sflag [#allocation4], %s315
        %s317 = sand.u32 %s98, 1
        %s318 = smul.addr %s317, 8
        %s319 = scalar_lea.vmem [#allocation3], %s318
        // Predicated region
        $region74: #{decoder_forward.1} parent=68 // pred_check
          %p320 = pneg %p108
        $region75: #{decoder_forward.1} parent=68 // pred_check_branch
          %322 = sbr.rel (%p320) target = $region77
        $region76: #{decoder_forward.1} parent=68 // pred_region
          %324 = vsyncadd %s316, 0
          %s325 = smul.addr %s17, 8
          %s326 = scalar_lea.hbm %s3, %s325
          %s328 = sshll.u32 %s319, 4
          %s329 = int_to_ptr.vmem [resolvable:$true] %s328
          %s330 = sshll.u32 %s326, 4
          %s331 = int_to_ptr.hbm [resolvable:$true] %s330
          %333 = dma.vmem_to_hbm [thread:$0]  %s329, 128, %s331, %s316
        $region77: #{decoder_forward.1} parent=68 // pred_fallthru
          _
      $region69: #{decoder_forward.1} parent=5 // pred_fallthru
        _
      %p334 = scmp.le.s32.totalorder 2, %s12
      // Predicated region
      $region78: #{decoder_forward.1} parent=5 // pred_check
        %p335 = pneg %p334
      $region79: #{decoder_forward.1} parent=5 // pred_check_branch
        %337 = sbr.rel (%p335) target = $region81
      $region80: #{decoder_forward.1} parent=5 // pred_region
        %s338 = ssub.s32 %s12, 2
        // Predicated region
        $region82: #{decoder_forward.1} parent=80 // pred_check
          %p339 = pneg %p114
        $region83: #{decoder_forward.1} parent=80 // pred_check_branch
          %341 = sbr.rel (%p339) target = $region85
        $region84: #{decoder_forward.1} parent=80 // pred_region
          %s342 = sand.u32 %s99, 1
          %s343 = scalar_lea.sflag [#allocation4], %s342
          %s344 = sand.u32 %s99, 1
          %s345 = smul.addr %s344, 8
          %s346 = scalar_lea.vmem [#allocation3], %s345
          %348 = dma.done %s343, 128
        $region85: #{decoder_forward.1} parent=80 // pred_fallthru
          _
      $region81: #{decoder_forward.1} parent=5 // pred_fallthru
        _
    $region6: #{decoder_forward.1} parent=1 // loop_footer
      %s16 = sadd.s32 1, %s12
    $region7: #{decoder_forward.1} parent=1 // loop_footer_branch
      %11 = sbr.rel target = $region3
    $region8: #{decoder_forward.1} parent=1 // loop_exit
      _
    %349 = vsyncpa [#allocation4], 1
    %s350 = scalar_lea.sflag [#allocation4], 1
    %351 = vsyncpa %s350, 1

</llo_original>
